<compile_context>
chip_gen: v6e
topology: v6e:2x2x1
jax: 0.10.0
libtpu: 0.0.40
codegen_flags: <defaults>
</compile_context>

<pallas_src>
import functools

import jax
import jax.numpy as jnp
import numpy as np
from jax import lax
from jax.experimental import pallas as pl
from jax.experimental.pallas import tpu as pltpu


# --------------------------------------------------------------------------
# Kernel 1: squared pairwise L2 distances for a tile of batches in one step.
# --------------------------------------------------------------------------
def _pairwise_dist2_kernel(x_ref, d2_ref):
    x = x_ref[...].astype(jnp.float32)                     # (bt, n, d)
    gram = jnp.einsum("bnd,bmd->bnm", x, x,
                      preferred_element_type=jnp.float32)  # (bt, n, n)
    xx = x * x
    sq_col = jnp.sum(xx, axis=-1, keepdims=True)           # (bt, n, 1)
    sq_row = jnp.sum(xx, axis=-1)[:, None, :]              # (bt, 1, n)
    d2 = sq_col + sq_row - 2.0 * gram
    d2_ref[...] = jnp.maximum(d2, 0.0)


def pairwise_dist2(x, *, b_tile=None):
    B, n, d = x.shape
    bt = B if b_tile is None else b_tile
    assert B % bt == 0
    return pl.pallas_call(
        _pairwise_dist2_kernel,
        out_shape=jax.ShapeDtypeStruct((B, n, n), jnp.float32),
        grid=(B // bt,),
        in_specs=[pl.BlockSpec((bt, n, d), lambda b: (b, 0, 0))],
        out_specs=pl.BlockSpec((bt, n, n), lambda b: (b, 0, 0)),
        compiler_params=pltpu.CompilerParams(
            dimension_semantics=("parallel",)),
    )(x)


# --------------------------------------------------------------------------
# Kernel 2: fused pair interaction for the whole batch in one grid step.
#   anchor_aug = [x | 1 | z]      (B*n, d+1+z_in)
#   nbr_flat   = neighbors only   (K*B*n, d), row order (k, b, i)
#   wm_aug/wv_aug carry  W_x[:d] ; (b_x + b_z) ; W_z   -> anchor matmul gives
#   x@W[:d] + bias + z-offset in a single MXU pass; the neighbor halves go
#   through one big (K*B*n, d) @ (d, out) matmul each.
# --------------------------------------------------------------------------
def _pair_interaction_kernel(anchor_ref, nbr_ref, wma_ref, wmn_ref,
                             wva_ref, wvn_ref, xnew_ref, znew_ref,
                             *, b_tile, n, n_nbr):
    anchor = anchor_ref[...]                               # (bn, d_aug)
    nbr = nbr_ref[...]                                     # (K*bn, d)
    wm_a = wma_ref[...]                                    # (d_aug, d_out)
    wm_n = wmn_ref[...]                                    # (d, d_out)
    wv_a = wva_ref[...]                                    # (d_aug, nmoments)
    wv_n = wvn_ref[...]                                    # (d, nmoments)

    f32 = jnp.float32
    am = jnp.dot(anchor, wm_a, preferred_element_type=f32)   # (bn, d_out)
    av = jnp.dot(anchor, wv_a, preferred_element_type=f32)   # (bn, nmoments)
    nm = jnp.dot(nbr, wm_n, preferred_element_type=f32)      # (K*bn, d_out)
    nv = jnp.dot(nbr, wv_n, preferred_element_type=f32)      # (K*bn, nmoments)

    bn = b_tile * n
    acc_x = jnp.zeros_like(am)
    acc_z = jnp.zeros_like(av)
    for k in range(n_nbr):                                   # static, small
        off = k * bn
        acc_x = acc_x + jnp.maximum(am + nm[off:off + bn, :], 0.0)
        acc_z = acc_z + jnp.maximum(av + nv[off:off + bn, :], 0.0)

    xnew_ref[...] = (acc_x * (1.0 / n_nbr)).astype(xnew_ref.dtype)

    # per-batch reduction over the n points, single store at the end
    inv = 1.0 / float(n_nbr * n)
    rows = [jnp.sum(acc_z[j * n:(j + 1) * n, :], axis=0, keepdims=True)
            for j in range(b_tile)]                          # static, small
    znew_ref[...] = (jnp.concatenate(rows, axis=0) * inv).astype(znew_ref.dtype)


def pair_interaction(anchor_aug, nbr_flat, wm_aug, wm_n, wv_aug, wv_n,
                     *, B, n, n_nbr):
    bn, d_aug = anchor_aug.shape
    d = nbr_flat.shape[1]
    d_out = wm_aug.shape[1]
    nmoments = wv_aug.shape[1]
    kern = functools.partial(_pair_interaction_kernel,
                             b_tile=B, n=n, n_nbr=n_nbr)
    return pl.pallas_call(
        kern,
        out_shape=(jax.ShapeDtypeStruct((B * n, d_out), jnp.float32),
                   jax.ShapeDtypeStruct((B, nmoments), jnp.float32)),
        grid=(1,),
        in_specs=[
            pl.BlockSpec((B * n, d_aug), lambda t: (0, 0)),
            pl.BlockSpec((n_nbr * B * n, d), lambda t: (0, 0)),
            pl.BlockSpec((d_aug, d_out), lambda t: (0, 0)),
            pl.BlockSpec((d, d_out), lambda t: (0, 0)),
            pl.BlockSpec((d_aug, nmoments), lambda t: (0, 0)),
            pl.BlockSpec((d, nmoments), lambda t: (0, 0)),
        ],
        out_specs=(
            pl.BlockSpec((B * n, d_out), lambda t: (0, 0)),
            pl.BlockSpec((B, nmoments), lambda t: (0, 0)),
        ),
        compiler_params=pltpu.CompilerParams(
            dimension_semantics=("parallel",)),
    )(anchor_aug, nbr_flat, wm_aug, wm_n, wv_aug, wv_n)


# --------------------------------------------------------------------------
# Parameter init (deterministic, mimics nn.Linear's U(-1/sqrt(fan_in), ...)).
# --------------------------------------------------------------------------
def init_params(key, d, d_out, nmoments, first=True):
    def linear(k, fan_in, fan_out):
        kw, kb = jax.random.split(k)
        bound = 1.0 / float(np.sqrt(fan_in))
        w = jax.random.uniform(kw, (fan_in, fan_out), jnp.float32, -bound, bound)
        b = jax.random.uniform(kb, (1, fan_out), jnp.float32, -bound, bound)
        return w, b

    z_in = 1 if first else nmoments
    k = jax.random.split(key, 4)
    p = {}
    p["meas_x_w"], p["meas_x_b"] = linear(k[0], 2 * d, d_out)
    p["vect_x_w"], p["vect_x_b"] = linear(k[1], 2 * d, nmoments)
    p["meas_z_w"], p["meas_z_b"] = linear(k[2], z_in, d_out)
    p["vect_z_w"], p["vect_z_b"] = linear(k[3], z_in, nmoments)
    return p


# --------------------------------------------------------------------------
# Full forward (glue in plain JAX, hot paths in Pallas).
# --------------------------------------------------------------------------
def elementary_block_forward(x, z, params, *, N):
    B, n, d = x.shape
    d_out = params["meas_x_w"].shape[1]
    K = N - 1

    # squared pairwise distances in Pallas; sqrt dropped (order preserving).
    d2 = pairwise_dist2(x)                             # (B, n, n)
    # TODO(synk): torch.topk(largest=False) has no Pallas sort/top-k primitive; done with lax.top_k.
    _, idx = lax.top_k(-d2, N)                         # N smallest, ascending
    nn_idx = idx[:, :, 1:]                             # drop self -> (B, n, K)

    # gather only the neighbor half of each pair (anchor half is factored out
    # of the matmul inside the kernel).
    # TODO(synk): gather kept in XLA glue; fusing it via scalar-prefetched
    # indices + in-VMEM jnp.take would remove this HBM intermediate entirely.
    gather = jax.vmap(lambda pts, ids: pts[ids])       # (n,d),(n,K) -> (n,K,d)
    x_nbr = gather(x, nn_idx)                          # (B, n, K, d)
    nbr_flat = jnp.transpose(x_nbr, (2, 0, 1, 3)).reshape(K * B * n, d)

    # anchor features augmented with [1, z]: folds the x-bias, z-bias and the
    # meas_z / vect_z projections into the single anchor matmul.
    z_in = z.shape[1]
    ones = jnp.ones((B, n, 1), x.dtype)
    z_bc = jnp.broadcast_to(z[:, None, :], (B, n, z_in)).astype(x.dtype)
    anchor_aug = jnp.concatenate([x, ones, z_bc], axis=-1).reshape(
        B * n, d + 1 + z_in)

    wm_aug = jnp.concatenate([params["meas_x_w"][:d],
                              params["meas_x_b"] + params["meas_z_b"],
                              params["meas_z_w"]], axis=0)   # (d+1+z_in, d_out)
    wv_aug = jnp.concatenate([params["vect_x_w"][:d],
                              params["vect_x_b"] + params["vect_z_b"],
                              params["vect_z_w"]], axis=0)   # (d+1+z_in, nmom)
    wm_n = params["meas_x_w"][d:]                            # (d, d_out)
    wv_n = params["vect_x_w"][d:]                            # (d, nmoments)

    x_new, z_new = pair_interaction(anchor_aug, nbr_flat, wm_aug, wm_n,
                                    wv_aug, wv_n, B=B, n=n, n_nbr=K)
    return x_new.reshape(B, n * d_out), z_new, nn_idx


# --------------------------------------------------------------------------
# Pure-JAX reference (reuses the same NN indices) for validation.
# --------------------------------------------------------------------------
def reference_forward(x, z, params, nn_idx, N):
    B, n, d = x.shape
    d_out = params["meas_x_w"].shape[1]
    gather = jax.vmap(lambda pts, ids: pts[ids])
    x_nbr = gather(x, nn_idx)                                   # (B, n, N-1, d)
    x_anchor = jnp.broadcast_to(x[:, :, None, :], x_nbr.shape)
    pairs = jnp.concatenate([x_anchor, x_nbr], axis=-1)         # (B, n, N-1, 2d)
    pairs = pairs.reshape(B, n * (N - 1), 2 * d)

    zm = z @ params["meas_z_w"] + params["meas_z_b"]            # (B, d_out)
    zv = z @ params["vect_z_w"] + params["vect_z_b"]            # (B, nmoments)

    h = pairs @ params["meas_x_w"] + params["meas_x_b"] + zm[:, None, :]
    h = jax.nn.relu(h).reshape(B, n, N - 1, d_out).sum(axis=2) / (N - 1)
    x_new = h.reshape(B, n * d_out)

    g = pairs @ params["vect_x_w"] + params["vect_x_b"] + zv[:, None, :]
    z_new = jax.nn.relu(g).sum(axis=1) / ((N - 1) * n)
    return x_new, z_new


if __name__ == "__main__":
    B, npoints, d, N = 2, 8, 4, 4
    d_out, nmoments = 8, 8

    key = jax.random.PRNGKey(0)
    kx, kz, kp = jax.random.split(key, 3)
    x = jax.random.normal(kx, (B, npoints, d), jnp.float32)
    z = jax.random.normal(kz, (B, 1), jnp.float32)     # first=True -> z has 1 feature
    params = init_params(kp, d, d_out, nmoments, first=True)

    x_new, z_new, nn_idx = elementary_block_forward(x, z, params, N=N)
    jax.block_until_ready((x_new, z_new))

    assert x_new.shape == (B, npoints * d_out)
    assert z_new.shape == (B, nmoments)

    # validate distance kernel and the fused pair-interaction kernel
    d2_ref = jnp.sum((x[:, :, None, :] - x[:, None, :, :]) ** 2, axis=-1)
    np.testing.assert_allclose(np.asarray(pairwise_dist2(x)), np.asarray(d2_ref),
                               rtol=1e-4, atol=1e-4)
    x_ref, z_ref = reference_forward(x, z, params, nn_idx, N)
    np.testing.assert_allclose(np.asarray(x_new), np.asarray(x_ref), rtol=1e-4, atol=1e-5)
    np.testing.assert_allclose(np.asarray(z_new), np.asarray(z_ref), rtol=1e-4, atol=1e-5)

    print("KERNEL_OK")
</pallas_src>

<mosaic_0001>
module attributes {stable_mosaic.version = 11 : i64} {
  func.func @_pairwise_dist2_kernel(%arg0: i32, %arg1: memref<2x8x4xf32, #tpu.memory_space<vmem>>, %arg2: memref<2x8x8xf32, #tpu.memory_space<vmem>>) attributes {dimension_semantics = [#tpu.dimension_semantics<parallel>], iteration_bounds = array<i64: 1>, scalar_prefetch = 0 : i64, scratch_operands = 0 : i64, tpu.core_type = #tpu.core_type<tc>, window_params = [{transform_indices = @transform_0, window_bounds = array<i64: 2, 8, 4>}, {transform_indices = @transform_1, window_bounds = array<i64: 2, 8, 8>}]} {
    %c0 = arith.constant 0 : index
    %c0_0 = arith.constant 0 : index
    %c0_1 = arith.constant 0 : index
    %0 = vector.load %arg1[%c0, %c0_0, %c0_1] : memref<2x8x4xf32, #tpu.memory_space<vmem>>, vector<2x8x4xf32>
    "tpu.trace_start"() <{level = 10 : i32, message = "bnd,bmd->bnm"}> : () -> ()
    %cst = arith.constant dense<0.000000e+00> : vector<2x8x8xf32>
    %1 = tpu.matmul %0, %0, %cst {dimension_numbers = #tpu.dot_dimension_numbers<[2], [2], [1], [1], [0, 0, 0, 1, 1, 1], [0], [0]>} : vector<2x8x4xf32>, vector<2x8x4xf32>, vector<2x8x8xf32> -> vector<2x8x8xf32>
    "tpu.trace_stop"() : () -> ()
    %2 = arith.mulf %0, %0 : vector<2x8x4xf32>
    %cst_2 = arith.constant dense<0.000000e+00> : vector<2x8xf32>
    %3 = vector.multi_reduction <add>, %2, %cst_2 [2] : vector<2x8x4xf32> to vector<2x8xf32>
    %4 = vector.shape_cast %3 : vector<2x8xf32> to vector<2x8x1xf32>
    %cst_3 = arith.constant dense<0.000000e+00> : vector<2x8xf32>
    %5 = vector.multi_reduction <add>, %2, %cst_3 [2] : vector<2x8x4xf32> to vector<2x8xf32>
    %6 = vector.shape_cast %5 : vector<2x8xf32> to vector<2x1x8xf32>
    %7 = vector.broadcast %4 : vector<2x8x1xf32> to vector<2x8x8xf32>
    %8 = vector.broadcast %6 : vector<2x1x8xf32> to vector<2x8x8xf32>
    %9 = arith.addf %7, %8 : vector<2x8x8xf32>
    %cst_4 = arith.constant 2.000000e+00 : f32
    %10 = vector.broadcast %cst_4 : f32 to vector<2x8x8xf32>
    %11 = arith.mulf %10, %1 : vector<2x8x8xf32>
    %12 = arith.subf %9, %11 : vector<2x8x8xf32>
    %cst_5 = arith.constant 0.000000e+00 : f32
    %13 = vector.broadcast %cst_5 : f32 to vector<2x8x8xf32>
    %14 = arith.maximumf %12, %13 : vector<2x8x8xf32>
    %c0_6 = arith.constant 0 : index
    %c0_7 = arith.constant 0 : index
    %c0_8 = arith.constant 0 : index
    %15 = vector.load %arg2[%c0_6, %c0_7, %c0_8] : memref<2x8x8xf32, #tpu.memory_space<vmem>>, vector<2x8x8xf32>
    tpu.vector_store %arg2[%c0_6, %c0_7, %c0_8], %14 {strides = array<i32>} : memref<2x8x8xf32, #tpu.memory_space<vmem>>, vector<2x8x8xf32>,
    return
  }
  func.func @transform_0(%arg0: i32) -> (i32, i32, i32) {
    %c0_i32 = arith.constant 0 : i32
    %c0_i32_0 = arith.constant 0 : i32
    %c0_i32_1 = arith.constant 0 : i32
    return %arg0, %c0_i32, %c0_i32_0 : i32, i32, i32
  }
  func.func @transform_1(%arg0: i32) -> (i32, i32, i32) {
    %c0_i32 = arith.constant 0 : i32
    %c0_i32_0 = arith.constant 0 : i32
    %c0_i32_1 = arith.constant 0 : i32
    return %arg0, %c0_i32, %c0_i32_0 : i32, i32, i32
  }
}

</mosaic_0001>

<llo_original>
// kernel: tpu_custom_call.1
$region0: #{tpu_custom_call.1}
  #allocation0 [shape = 'u32[]', space=smem, size = 0x4, offset = 0x4, fixed_abs, tag = 'smem constant byte address 0x4 - core index']
  #allocation1 [shape = 'u32[144,128]{1,0:T(1,128)}', space=vmem, size = 0x12000, scoped, tag = 'internal scratch']
  %s0 = inlined_call_operand.vmem [shape: f32[2,8,4], index: 0, kind: input, shape index: {}]
  %s1 = inlined_call_operand.hbm [shape: f32[2,8,8], index: 1, kind: output, shape index: {}]
  %s2 = sld [smem:[#allocation0]]
  $region14: #{tpu_custom_call.1} parent=0
    _
  %s4 = ssub.s32 1, %s2
  %s5 = scalar_select 0, %s4, %s2
  $region1: #{tpu_custom_call.1} parent=0
    #allocation2 [shape = 'u8[8192]{0}', space=vmem, size = 0x2000, scoped, tag = 'output window, operand 0, single buffered']
    #allocation3 [shape = 's32[1]{0}', space=sflag, size = 0x4, scoped, tag = 'scoped memory for tpu_custom_call.1']
    %6 = vsyncpa [#allocation3], 0
    // Predicated region
    $region2: #{tpu_custom_call.1} parent=1 // pred_check
      _
    $region3: #{tpu_custom_call.1} parent=1 // pred_check_branch
      %8 = sbr.rel (0) target = $region5
    $region4: #{tpu_custom_call.1} parent=1 // pred_region
      _
    $region5: #{tpu_custom_call.1} parent=1 // pred_fallthru
      _
    %v9 = vld [vmem:[%s0] sm:$0xff]
    %v10 = vld [vmem:[%s0 + $0x8] sm:$0xff]
    %vm11 = vcmask 31744
    %v13 = vsel %vm11, %v9, 0
    %15 = vmatprep.subr.mxu0 0.0
    %16 = vmatpush1.xpose.msra.mxu0 0.0
    %17 = vmatprep.subr.mxu0 0.0
    %18 = vmatpush1.xpose.msra.mxu0 0.0
    %19 = vmatprep.subr.mxu0 0.0
    %20 = vmatpush1.xpose.msra.mxu0 0.0
    %21 = vmatprep.subr.mxu0 0.0
    %22 = vmatpush1.xpose.msra.mxu0 0.0
    %23 = vmatprep.subr.mxu0 0.0
    %24 = vmatpush1.xpose.msra.mxu0 0.0
    %25 = vmatprep.subr.mxu0 0.0
    %26 = vmatpush1.xpose.msra.mxu0 0.0
    %27 = vmatprep.subr.mxu0 0.0
    %28 = vmatpush1.xpose.msra.mxu0 0.0
    %29 = vmatprep.subr.mxu0 0.0
    %30 = vmatpush1.xpose.msra.mxu0 0.0
    %31 = vmatprep.subr.mxu0 0.0
    %32 = vmatpush1.xpose.msra.mxu0 0.0
    %33 = vmatprep.subr.mxu0 0.0
    %34 = vmatpush1.xpose.msra.mxu0 0.0
    %35 = vmatprep.subr.mxu0 0.0
    %36 = vmatpush1.xpose.msra.mxu0 0.0
    %37 = vmatprep.subr.mxu0 0.0
    %38 = vmatpush1.xpose.msra.mxu0 0.0
    %39 = vmatprep.subr.mxu0 0.0
    %40 = vmatpush1.xpose.msra.mxu0 0.0
    %41 = vmatprep.subr.mxu0 0.0
    %42 = vmatpush1.xpose.msra.mxu0 0.0
    %43 = vmatprep.subr.mxu0 0.0
    %44 = vmatpush1.xpose.msra.mxu0 0.0
    %45 = vmatprep.subr.mxu0 0.0
    %46 = vmatpush1.xpose.msra.mxu0 %v13
    %47 = vmatprep.subr.mxu0 0.0
    %48 = vmatpush2.xpose.msra.mxu0 0.0
    %49 = vmatprep.subr.mxu0 0.0
    %50 = vmatpush2.xpose.msra.mxu0 0.0
    %51 = vmatprep.subr.mxu0 0.0
    %52 = vmatpush2.xpose.msra.mxu0 0.0
    %53 = vmatprep.subr.mxu0 0.0
    %54 = vmatpush2.xpose.msra.mxu0 0.0
    %55 = vmatprep.subr.mxu0 0.0
    %56 = vmatpush2.xpose.msra.mxu0 0.0
    %57 = vmatprep.subr.mxu0 0.0
    %58 = vmatpush2.xpose.msra.mxu0 0.0
    %59 = vmatprep.subr.mxu0 0.0
    %60 = vmatpush2.xpose.msra.mxu0 0.0
    %61 = vmatprep.subr.mxu0 0.0
    %62 = vmatpush2.xpose.msra.mxu0 0.0
    %63 = vmatprep.subr.mxu0 0.0
    %64 = vmatpush2.xpose.msra.mxu0 0.0
    %65 = vmatprep.subr.mxu0 0.0
    %66 = vmatpush2.xpose.msra.mxu0 0.0
    %67 = vmatprep.subr.mxu0 0.0
    %68 = vmatpush2.xpose.msra.mxu0 0.0
    %69 = vmatprep.subr.mxu0 0.0
    %70 = vmatpush2.xpose.msra.mxu0 0.0
    %71 = vmatprep.subr.mxu0 0.0
    %72 = vmatpush2.xpose.msra.mxu0 0.0
    %73 = vmatprep.subr.mxu0 0.0
    %74 = vmatpush2.xpose.msra.mxu0 0.0
    %75 = vmatprep.subr.mxu0 0.0
    %76 = vmatpush2.xpose.msra.mxu0 0.0
    %77 = vmatprep.subr.mxu0 0.0
    %78 = vmatpush2.xpose.msra.mxu0 0.0
    %79 = vmatprep.mubr.f32.mxu0 0.0
    %80 = vmatmul.mubr.f32.gmra.mxu0 %v13
    %v81 = vpop.f32.mrf.mxu0
    %v82 = vadd.f32 0.0, %v81
    %v83 = vpop.f32.mrf.mxu0
    %84 = vdwg.mxu0
    %v86 = vsel %vm11, %v10, 0
    %88 = vmatprep.subr.mxu0 0.0
    %89 = vmatpush1.xpose.msra.mxu0 0.0
    %90 = vmatprep.subr.mxu0 0.0
    %91 = vmatpush1.xpose.msra.mxu0 0.0
    %92 = vmatprep.subr.mxu0 0.0
    %93 = vmatpush1.xpose.msra.mxu0 0.0
    %94 = vmatprep.subr.mxu0 0.0
    %95 = vmatpush1.xpose.msra.mxu0 0.0
    %96 = vmatprep.subr.mxu0 0.0
    %97 = vmatpush1.xpose.msra.mxu0 0.0
    %98 = vmatprep.subr.mxu0 0.0
    %99 = vmatpush1.xpose.msra.mxu0 0.0
    %100 = vmatprep.subr.mxu0 0.0
    %101 = vmatpush1.xpose.msra.mxu0 0.0
    %102 = vmatprep.subr.mxu0 0.0
    %103 = vmatpush1.xpose.msra.mxu0 0.0
    %104 = vmatprep.subr.mxu0 0.0
    %105 = vmatpush1.xpose.msra.mxu0 0.0
    %106 = vmatprep.subr.mxu0 0.0
    %107 = vmatpush1.xpose.msra.mxu0 0.0
    %108 = vmatprep.subr.mxu0 0.0
    %109 = vmatpush1.xpose.msra.mxu0 0.0
    %110 = vmatprep.subr.mxu0 0.0
    %111 = vmatpush1.xpose.msra.mxu0 0.0
    %112 = vmatprep.subr.mxu0 0.0
    %113 = vmatpush1.xpose.msra.mxu0 0.0
    %114 = vmatprep.subr.mxu0 0.0
    %115 = vmatpush1.xpose.msra.mxu0 0.0
    %116 = vmatprep.subr.mxu0 0.0
    %117 = vmatpush1.xpose.msra.mxu0 0.0
    %118 = vmatprep.subr.mxu0 0.0
    %119 = vmatpush1.xpose.msra.mxu0 %v86
    %120 = vmatprep.subr.mxu0 0.0
    %121 = vmatpush2.xpose.msra.mxu0 0.0
    %122 = vmatprep.subr.mxu0 0.0
    %123 = vmatpush2.xpose.msra.mxu0 0.0
    %124 = vmatprep.subr.mxu0 0.0
    %125 = vmatpush2.xpose.msra.mxu0 0.0
    %126 = vmatprep.subr.mxu0 0.0
    %127 = vmatpush2.xpose.msra.mxu0 0.0
    %128 = vmatprep.subr.mxu0 0.0
    %129 = vmatpush2.xpose.msra.mxu0 0.0
    %130 = vmatprep.subr.mxu0 0.0
    %131 = vmatpush2.xpose.msra.mxu0 0.0
    %132 = vmatprep.subr.mxu0 0.0
    %133 = vmatpush2.xpose.msra.mxu0 0.0
    %134 = vmatprep.subr.mxu0 0.0
    %135 = vmatpush2.xpose.msra.mxu0 0.0
    %136 = vmatprep.subr.mxu0 0.0
    %137 = vmatpush2.xpose.msra.mxu0 0.0
    %138 = vmatprep.subr.mxu0 0.0
    %139 = vmatpush2.xpose.msra.mxu0 0.0
    %140 = vmatprep.subr.mxu0 0.0
    %141 = vmatpush2.xpose.msra.mxu0 0.0
    %142 = vmatprep.subr.mxu0 0.0
    %143 = vmatpush2.xpose.msra.mxu0 0.0
    %144 = vmatprep.subr.mxu0 0.0
    %145 = vmatpush2.xpose.msra.mxu0 0.0
    %146 = vmatprep.subr.mxu0 0.0
    %147 = vmatpush2.xpose.msra.mxu0 0.0
    %148 = vmatprep.subr.mxu0 0.0
    %149 = vmatpush2.xpose.msra.mxu0 0.0
    %150 = vmatprep.subr.mxu0 0.0
    %151 = vmatpush2.xpose.msra.mxu0 0.0
    %152 = vmatprep.mubr.f32.mxu0 0.0
    %153 = vmatmul.mubr.f32.gmra.mxu0 %v86
    %v154 = vpop.f32.mrf.mxu0
    %v155 = vadd.f32 0.0, %v154
    %v156 = vpop.f32.mrf.mxu0
    %157 = vdwg.mxu0
    %v158 = vmul.f32 %v9, %v9
    %v159 = vmul.f32 %v10, %v10
    %v160 = vsel %vm11, %v158, 0.0
    %161 = vadd.xlane.f32.xlu0 %v160
    %v162 = vpop.xlane.xlu0 %161
    %v163 = vsel %vm11, %v159, 0.0
    %164 = vadd.xlane.f32.xlu0 %v163
    %v165 = vpop.xlane.xlu0 %164
    %v168 = vlaneseq
    %v169 = vand.u32 %v168, 127
    %v170 = vlaneseq
    %v171 = vshrl.u32 %v170, 7
    %v172 = vsub.s32 %v169, %v171
    %v173 = vrot.slane %v162, %v172
    %v174 = vlaneseq
    %v175 = vshrl.u32 %v174, 7
    %v176 = vsub.s32 %v169, %v175
    %v177 = vrot.slane %v165, %v176
    %vm178 = vcmask 1042434
    %v179 = vsel %vm178, %v173, %v173
    %vm180 = vcmask 1043459
    %v181 = vsel %vm180, %v173, %v179
    %vm182 = vcmask 1044484
    %v183 = vsel %vm182, %v173, %v181
    %vm184 = vcmask 1045509
    %v185 = vsel %vm184, %v173, %v183
    %vm186 = vcmask 1046534
    %v187 = vsel %vm186, %v173, %v185
    %vm188 = vcmask 1047559
    %v189 = vsel %vm188, %v173, %v187
    %v190 = vsel %vm178, %v177, %v177
    %v191 = vsel %vm180, %v177, %v190
    %v192 = vsel %vm182, %v177, %v191
    %v193 = vsel %vm184, %v177, %v192
    %v194 = vsel %vm186, %v177, %v193
    %v195 = vsel %vm188, %v177, %v194
    %v198 = vadd.f32 %v162, %v189
    %v199 = vadd.f32 %v165, %v195
    %v200 = vmul.f32 %v82, 2.0
    %v201 = vmul.f32 %v155, 2.0
    %v202 = vsub.f32 %v198, %v200
    %v203 = vsub.f32 %v199, %v201
    %v204 = vmax.f32 %v202, 0.0
    %v205 = vmax.f32 %v203, 0.0
    %vm206 = vcmask 64512
    %207 = vst.msk [vmem:[#allocation2] sm:$0xff] %vm206, %v204
    %208 = vst.msk [vmem:[#allocation2 + $0x8] sm:$0xff] %vm206, %v205
    // Predicated region
    $region6: #{tpu_custom_call.1} parent=1 // pred_check
      _
    $region7: #{tpu_custom_call.1} parent=1 // pred_check_branch
      %210 = sbr.rel (0) target = $region9
    $region8: #{tpu_custom_call.1} parent=1 // pred_region
      %s212 = ssub.s32 256, 256
      %213 = vsyncadd [#allocation3], %s212
      %s214 = sshll.u32 [#allocation2], 4
      %s215 = int_to_ptr.vmem [resolvable:$true] %s214
      %220 = dma.vmem_to_hbm [thread:$0]  %s215, 256, %s1, [#allocation3], 128, 128, 8
    $region9: #{tpu_custom_call.1} parent=1 // pred_fallthru
      _
    // Predicated region
    $region10: #{tpu_custom_call.1} parent=1 // pred_check
      _
    $region11: #{tpu_custom_call.1} parent=1 // pred_check_branch
      %222 = sbr.rel (0) target = $region13
    $region12: #{tpu_custom_call.1} parent=1 // pred_region
      %223 = dma.done [#allocation3], 256
    $region13: #{tpu_custom_call.1} parent=1 // pred_fallthru
      _
    %224 = vsyncpa [#allocation3], 1

</llo_original>
